<compile_context>
chip_gen: v5e
topology: v5e:2x2
jax: 0.10.0
libtpu: 0.0.40
codegen_flags: <defaults>
</compile_context>

<pallas_src>
import jax
import jax.numpy as jnp
from jax.experimental import pallas as pl
from jax.experimental.pallas import tpu as pltpu


_VMEM_TILE_BUDGET = 24 * 1024 * 1024   # double-buffered activation tiles; conservative on all gens
_VMEM_LIMIT = 48 * 1024 * 1024         # > 16/32 MiB scoped defaults (v5e/v6e), < v7x 64 MiB physical


def _pick_hw_tile(hw, cin, cout, itemsize):
    """Lane-dense HW tile that keeps double-buffered x/pyr/out tiles under the VMEM budget."""
    if hw % 128 != 0:
        # Full-extent block is always legal.
        # TODO(synk): pad HW to a multiple of 128 for very large non-aligned feature maps.
        return hw
    bytes_per_col = 2 * (cin + 2 * cout) * itemsize          # x + pyr + out, double-buffered
    cols = max(128, (_VMEM_TILE_BUDGET // bytes_per_col) // 128 * 128)
    return int(min(hw, 2048, cols))


def _make_se_scale_kernel(chunk_sizes, hw, t_hw):
    """Global-average-pool + SE MLP. Grid = (N, num_hw_tiles); HW axis is a reduction."""
    nf = len(chunk_sizes)
    ragged = (hw % t_hw) != 0
    inv_hw = 1.0 / hw

    def kernel(*refs):
        x_refs = refs[:nf]
        w1_ref, b1_ref, w2_ref, b2_ref = refs[nf:nf + 4]
        s_ref = refs[nf + 4]                                  # (Cin, 1) f32, resident across HW tiles

        t = pl.program_id(1)

        @pl.when(t == 0)
        def _():
            s_ref[...] = jnp.zeros_like(s_ref)

        # Partial pool: XLU lane reduce per chunk, accumulated in f32 in the output ref.
        off = 0
        for x_ref, ci in zip(x_refs, chunk_sizes):
            xi = x_ref[...].astype(jnp.float32)               # (ci, t_hw)
            if ragged:
                lane = jax.lax.broadcasted_iota(jnp.int32, xi.shape, 1)
                valid = hw - t * t_hw                         # >= t_hw except on the last tile
                xi = jnp.where(lane < valid, xi, 0.0)
            part = jnp.sum(xi, axis=-1, keepdims=True)        # (ci, 1) f32
            s_ref[off:off + ci, :] = s_ref[off:off + ci, :] + part
            off += ci

        # Finalize: SE MLP (f32, column orientation) -> sigmoid scale.
        @pl.when(t == pl.num_programs(1) - 1)
        def _():
            pooled = s_ref[...] * inv_hw                                              # (Cin, 1)
            h = jnp.dot(w1_ref[...], pooled, preferred_element_type=jnp.float32) + b1_ref[...]
            h = jnp.maximum(h, 0.0)                                                   # (hidden, 1)
            z = jnp.dot(w2_ref[...], h, preferred_element_type=jnp.float32) + b2_ref[...]
            s_ref[...] = 1.0 / (1.0 + jnp.exp(-z))                                    # (Cin, 1)

    return kernel


def _make_fuse_conv_kernel(chunk_sizes):
    """Scale-folded 1x1 conv + residual. Grid = (N, num_hw_tiles), fully parallel."""
    nf = len(chunk_sizes)

    def kernel(*refs):
        x_refs = refs[:nf]
        pyr_ref, wcs_ref, o_ref = refs[nf], refs[nf + 1], refs[nf + 2]

        acc = pyr_ref[...].astype(jnp.float32)                # (Cout, t_hw) f32 accumulator
        off = 0
        for x_ref, ci in zip(x_refs, chunk_sizes):
            acc = acc + jnp.dot(wcs_ref[:, off:off + ci], x_ref[...],
                                preferred_element_type=jnp.float32)
            off += ci
        o_ref[...] = acc.astype(o_ref.dtype)

    return kernel


def fuse_senet(pyramid_nchw, inter_features_nchw, params):
    """pyramid_nchw: (N, Cout, H, W); inter_features_nchw: list of (N, Ci, H, W)."""
    w1, b1, w2, b2, wc = params
    N, Cout, H, W = pyramid_nchw.shape
    HW = H * W
    chunk_sizes = tuple(int(f.shape[1]) for f in inter_features_nchw)
    Cin = sum(chunk_sizes)
    hidden = w1.shape[0]
    act_dtype = pyramid_nchw.dtype
    itemsize = jnp.dtype(act_dtype).itemsize

    # Pure reshapes (no transposes, no concat): channels on sublanes, HW on lanes.
    xs = [f.reshape(N, c, HW) for f, c in zip(inter_features_nchw, chunk_sizes)]
    pyr = pyramid_nchw.reshape(N, Cout, HW)

    t_hw = _pick_hw_tile(HW, Cin, Cout, itemsize)
    num_t = pl.cdiv(HW, t_hw)

    # SE path runs in f32 (tiny weights).
    w1f, b1f, w2f, b2f = (p.astype(jnp.float32) for p in (w1, b1, w2, b2))

    x_specs = [pl.BlockSpec((pl.Squeezed(), c, t_hw), lambda n, t: (n, 0, t))
               for c in chunk_sizes]

    # ---------- Kernel 1: s = sigmoid(W2 @ relu(W1 @ avgpool_hw(x) + b1) + b2) ----------
    s = pl.pallas_call(
        _make_se_scale_kernel(chunk_sizes, HW, t_hw),
        out_shape=jax.ShapeDtypeStruct((N, Cin, 1), jnp.float32),
        grid_spec=pltpu.PrefetchScalarGridSpec(
            num_scalar_prefetch=0,
            grid=(N, num_t),
            in_specs=x_specs + [
                pl.BlockSpec((hidden, Cin), lambda n, t: (0, 0)),
                pl.BlockSpec((hidden, 1), lambda n, t: (0, 0)),
                pl.BlockSpec((Cin, hidden), lambda n, t: (0, 0)),
                pl.BlockSpec((Cin, 1), lambda n, t: (0, 0)),
            ],
            out_specs=pl.BlockSpec((pl.Squeezed(), Cin, 1), lambda n, t: (n, 0, 0)),
        ),
        compiler_params=pltpu.CompilerParams(
            dimension_semantics=("parallel", "arbitrary"),
            vmem_limit_bytes=_VMEM_LIMIT),
        cost_estimate=pl.CostEstimate(
            flops=2 * N * Cin * (HW + 2 * hidden),
            transcendentals=N * Cin,
            bytes_accessed=N * Cin * HW * itemsize + N * Cin * 4),
    )(*xs, w1f, b1f, w2f, b2f)

    # ---- Fold the f32 SE scale into the 1x1-conv weight (N*Cout*Cin values, plain XLA) ----
    wcs = (wc.astype(jnp.float32)[None, :, :] * jnp.transpose(s, (0, 2, 1))).astype(act_dtype)

    # ---------- Kernel 2: out = sum_i wcs[:, off_i:off_i+Ci] @ x_i + pyramid ----------
    out = pl.pallas_call(
        _make_fuse_conv_kernel(chunk_sizes),
        out_shape=jax.ShapeDtypeStruct((N, Cout, HW), act_dtype),
        grid_spec=pltpu.PrefetchScalarGridSpec(
            num_scalar_prefetch=0,
            grid=(N, num_t),
            in_specs=x_specs + [
                pl.BlockSpec((pl.Squeezed(), Cout, t_hw), lambda n, t: (n, 0, t)),
                pl.BlockSpec((pl.Squeezed(), Cout, Cin), lambda n, t: (n, 0, 0)),
            ],
            out_specs=pl.BlockSpec((pl.Squeezed(), Cout, t_hw), lambda n, t: (n, 0, t)),
        ),
        compiler_params=pltpu.CompilerParams(
            dimension_semantics=("parallel", "parallel"),
            vmem_limit_bytes=_VMEM_LIMIT),
        cost_estimate=pl.CostEstimate(
            flops=N * HW * Cout * (2 * Cin + 1),
            transcendentals=0,
            bytes_accessed=N * (Cin + 2 * Cout) * HW * itemsize + N * Cout * Cin * itemsize),
    )(*xs, pyr, wcs)

    return out.reshape(N, Cout, H, W)


def init_params(key, in_channels, hidden, out_channels, dtype=jnp.float32):
    k1, k2, k3, k4, k5 = jax.random.split(key, 5)
    # PyTorch layout: weights are (out_channels, in_channels); biases as columns.
    w1 = jax.random.normal(k1, (hidden, in_channels), dtype) * 0.1       # SE squeeze FC
    b1 = jax.random.normal(k2, (hidden, 1), dtype) * 0.1
    w2 = jax.random.normal(k3, (in_channels, hidden), dtype) * 0.1       # SE excite FC
    b2 = jax.random.normal(k4, (in_channels, 1), dtype) * 0.1
    wc = jax.random.normal(k5, (out_channels, in_channels), dtype) * 0.1  # 1x1 conv, no bias
    return (w1, b1, w2, b2, wc)


def _reference(pyramid, inter_features, params):
    w1, b1, w2, b2, wc = params
    feat = jnp.concatenate(inter_features, axis=1)                 # (N, Cin, H, W)
    pooled = feat.mean(axis=(2, 3))                                # (N, Cin)
    h = jnp.maximum(pooled @ w1.T + b1[:, 0], 0.0)                 # (N, hidden)
    s = jax.nn.sigmoid(h @ w2.T + b2[:, 0])                        # (N, Cin)
    scaled = feat * s[:, :, None, None]
    out = jnp.einsum("nchw,oc->nohw", scaled, wc)
    return out + pyramid


if __name__ == "__main__":
    key = jax.random.PRNGKey(0)
    k_pyr, k_par, *k_feats = jax.random.split(key, 6)

    N, H, W = 2, 16, 16                          # HW = 256 -> lane-dense (>=128) tiles
    # four inter-feature maps of 16 channels each -> in_channels = 64
    inter_features = [jax.random.normal(k, (N, 16, H, W), jnp.float32) for k in k_feats]
    in_channels = sum(f.shape[1] for f in inter_features)          # 64
    out_channels, hidden = 32, 32                                  # SqueezeExcitation2d(in, 32, in)

    pyramid = jax.random.normal(k_pyr, (N, out_channels, H, W), jnp.float32)
    params = init_params(k_par, in_channels, hidden, out_channels)

    # f32 path: tight check against the pure-JAX reference.
    out = jax.block_until_ready(fuse_senet(pyramid, inter_features, params))
    ref = _reference(pyramid, inter_features, params)
    assert out.shape == ref.shape
    assert jnp.allclose(out, ref, atol=1e-4, rtol=1e-4), "f32 mismatch vs reference"

    # bf16 activation path (the intended performance configuration): f32 accumulation inside.
    out_bf16 = jax.block_until_ready(
        fuse_senet(pyramid.astype(jnp.bfloat16),
                   [f.astype(jnp.bfloat16) for f in inter_features], params))
    assert jnp.allclose(out_bf16.astype(jnp.float32), ref, atol=0.1, rtol=0.1), "bf16 mismatch"

    print("KERNEL_OK")
</pallas_src>

<mosaic_0001>
module attributes {stable_mosaic.version = 11 : i64} {
  func.func @kernel(%arg0: i32, %arg1: i32, %arg2: memref<1x16x256xf32, #tpu.memory_space<vmem>>, %arg3: memref<1x16x256xf32, #tpu.memory_space<vmem>>, %arg4: memref<1x16x256xf32, #tpu.memory_space<vmem>>, %arg5: memref<1x16x256xf32, #tpu.memory_space<vmem>>, %arg6: memref<32x64xf32, #tpu.memory_space<vmem>>, %arg7: memref<32x1xf32, #tpu.memory_space<vmem>>, %arg8: memref<64x32xf32, #tpu.memory_space<vmem>>, %arg9: memref<64x1xf32, #tpu.memory_space<vmem>>, %arg10: memref<1x64x1xf32, #tpu.memory_space<vmem>>) attributes {dimension_semantics = [#tpu.dimension_semantics<parallel>, #tpu.dimension_semantics<arbitrary>], iteration_bounds = array<i64: 2, 1>, scalar_prefetch = 0 : i64, scratch_operands = 0 : i64, tpu.core_type = #tpu.core_type<tc>, window_params = [{transform_indices = @transform_0, window_bounds = array<i64: 1, 16, 256>}, {transform_indices = @transform_1, window_bounds = array<i64: 1, 16, 256>}, {transform_indices = @transform_2, window_bounds = array<i64: 1, 16, 256>}, {transform_indices = @transform_3, window_bounds = array<i64: 1, 16, 256>}, {pipeline_mode = #tpu.pipeline_mode<synchronous>, transform_indices = @transform_4, window_bounds = array<i64: 32, 64>}, {pipeline_mode = #tpu.pipeline_mode<synchronous>, transform_indices = @transform_5, window_bounds = array<i64: 32, 1>}, {pipeline_mode = #tpu.pipeline_mode<synchronous>, transform_indices = @transform_6, window_bounds = array<i64: 64, 32>}, {pipeline_mode = #tpu.pipeline_mode<synchronous>, transform_indices = @transform_7, window_bounds = array<i64: 64, 1>}, {transform_indices = @transform_8, window_bounds = array<i64: 1, 64, 1>}]} {
    %c0_i32 = arith.constant 0 : i32
    %0 = arith.cmpi eq, %arg1, %c0_i32 : i32
    %1 = arith.extui %0 : i1 to i32
    %c0_i32_0 = arith.constant 0 : i32
    %2 = arith.cmpi ne, %1, %c0_i32_0 : i32
    scf.if %2 {
      %cst_38 = arith.constant 0.000000e+00 : f32
      %46 = vector.broadcast %cst_38 : f32 to vector<64x1xf32>
      %c0_39 = arith.constant 0 : index
      %c0_40 = arith.constant 0 : index
      %c0_41 = arith.constant 0 : index
      %47 = vector.load %arg10[%c0_39, %c0_40, %c0_41] : memref<1x64x1xf32, #tpu.memory_space<vmem>>, vector<1x64x1xf32>
      %48 = vector.shape_cast %47 : vector<1x64x1xf32> to vector<64x1xf32>
      %49 = vector.shape_cast %46 : vector<64x1xf32> to vector<1x64x1xf32>
      tpu.vector_store %arg10[%c0_39, %c0_40, %c0_41], %49 {strides = array<i32>} : memref<1x64x1xf32, #tpu.memory_space<vmem>>, vector<1x64x1xf32>,
    } else {
    }
    %c0 = arith.constant 0 : index
    %c0_1 = arith.constant 0 : index
    %c0_2 = arith.constant 0 : index
    %3 = vector.load %arg2[%c0, %c0_1, %c0_2] : memref<1x16x256xf32, #tpu.memory_space<vmem>>, vector<1x16x256xf32>
    %4 = vector.shape_cast %3 : vector<1x16x256xf32> to vector<16x256xf32>
    %cst = arith.constant dense<0.000000e+00> : vector<16xf32>
    %5 = vector.multi_reduction <add>, %4, %cst [1] : vector<16x256xf32> to vector<16xf32>
    %6 = vector.shape_cast %5 : vector<16xf32> to vector<16x1xf32>
    %c0_3 = arith.constant 0 : index
    %c0_4 = arith.constant 0 : index
    %c0_5 = arith.constant 0 : index
    %7 = vector.load %arg10[%c0_3, %c0_4, %c0_5] : memref<1x64x1xf32, #tpu.memory_space<vmem>>, vector<1x16x1xf32>
    %8 = vector.shape_cast %7 : vector<1x16x1xf32> to vector<16x1xf32>
    %9 = arith.addf %8, %6 : vector<16x1xf32>
    %c0_6 = arith.constant 0 : index
    %c0_7 = arith.constant 0 : index
    %c0_8 = arith.constant 0 : index
    %10 = vector.load %arg10[%c0_6, %c0_7, %c0_8] : memref<1x64x1xf32, #tpu.memory_space<vmem>>, vector<1x16x1xf32>
    %11 = vector.shape_cast %10 : vector<1x16x1xf32> to vector<16x1xf32>
    %12 = vector.shape_cast %9 : vector<16x1xf32> to vector<1x16x1xf32>
    tpu.vector_store %arg10[%c0_6, %c0_7, %c0_8], %12 {strides = array<i32>} : memref<1x64x1xf32, #tpu.memory_space<vmem>>, vector<1x16x1xf32>,
    %c0_9 = arith.constant 0 : index
    %c0_10 = arith.constant 0 : index
    %c0_11 = arith.constant 0 : index
    %13 = vector.load %arg3[%c0_9, %c0_10, %c0_11] : memref<1x16x256xf32, #tpu.memory_space<vmem>>, vector<1x16x256xf32>
    %14 = vector.shape_cast %13 : vector<1x16x256xf32> to vector<16x256xf32>
    %cst_12 = arith.constant dense<0.000000e+00> : vector<16xf32>
    %15 = vector.multi_reduction <add>, %14, %cst_12 [1] : vector<16x256xf32> to vector<16xf32>
    %16 = vector.shape_cast %15 : vector<16xf32> to vector<16x1xf32>
    %c0_13 = arith.constant 0 : index
    %c16 = arith.constant 16 : index
    %c0_14 = arith.constant 0 : index
    %17 = vector.load %arg10[%c0_13, %c16, %c0_14] : memref<1x64x1xf32, #tpu.memory_space<vmem>>, vector<1x16x1xf32>
    %18 = vector.shape_cast %17 : vector<1x16x1xf32> to vector<16x1xf32>
    %19 = arith.addf %18, %16 : vector<16x1xf32>
    %c0_15 = arith.constant 0 : index
    %c16_16 = arith.constant 16 : index
    %c0_17 = arith.constant 0 : index
    %20 = vector.load %arg10[%c0_15, %c16_16, %c0_17] : memref<1x64x1xf32, #tpu.memory_space<vmem>>, vector<1x16x1xf32>
    %21 = vector.shape_cast %20 : vector<1x16x1xf32> to vector<16x1xf32>
    %22 = vector.shape_cast %19 : vector<16x1xf32> to vector<1x16x1xf32>
    tpu.vector_store %arg10[%c0_15, %c16_16, %c0_17], %22 {strides = array<i32>} : memref<1x64x1xf32, #tpu.memory_space<vmem>>, vector<1x16x1xf32>,
    %c0_18 = arith.constant 0 : index
    %c0_19 = arith.constant 0 : index
    %c0_20 = arith.constant 0 : index
    %23 = vector.load %arg4[%c0_18, %c0_19, %c0_20] : memref<1x16x256xf32, #tpu.memory_space<vmem>>, vector<1x16x256xf32>
    %24 = vector.shape_cast %23 : vector<1x16x256xf32> to vector<16x256xf32>
    %cst_21 = arith.constant dense<0.000000e+00> : vector<16xf32>
    %25 = vector.multi_reduction <add>, %24, %cst_21 [1] : vector<16x256xf32> to vector<16xf32>
    %26 = vector.shape_cast %25 : vector<16xf32> to vector<16x1xf32>
    %c0_22 = arith.constant 0 : index
    %c32 = arith.constant 32 : index
    %c0_23 = arith.constant 0 : index
    %27 = vector.load %arg10[%c0_22, %c32, %c0_23] : memref<1x64x1xf32, #tpu.memory_space<vmem>>, vector<1x16x1xf32>
    %28 = vector.shape_cast %27 : vector<1x16x1xf32> to vector<16x1xf32>
    %29 = arith.addf %28, %26 : vector<16x1xf32>
    %c0_24 = arith.constant 0 : index
    %c32_25 = arith.constant 32 : index
    %c0_26 = arith.constant 0 : index
    %30 = vector.load %arg10[%c0_24, %c32_25, %c0_26] : memref<1x64x1xf32, #tpu.memory_space<vmem>>, vector<1x16x1xf32>
    %31 = vector.shape_cast %30 : vector<1x16x1xf32> to vector<16x1xf32>
    %32 = vector.shape_cast %29 : vector<16x1xf32> to vector<1x16x1xf32>
    tpu.vector_store %arg10[%c0_24, %c32_25, %c0_26], %32 {strides = array<i32>} : memref<1x64x1xf32, #tpu.memory_space<vmem>>, vector<1x16x1xf32>,
    %c0_27 = arith.constant 0 : index
    %c0_28 = arith.constant 0 : index
    %c0_29 = arith.constant 0 : index
    %33 = vector.load %arg5[%c0_27, %c0_28, %c0_29] : memref<1x16x256xf32, #tpu.memory_space<vmem>>, vector<1x16x256xf32>
    %34 = vector.shape_cast %33 : vector<1x16x256xf32> to vector<16x256xf32>
    %cst_30 = arith.constant dense<0.000000e+00> : vector<16xf32>
    %35 = vector.multi_reduction <add>, %34, %cst_30 [1] : vector<16x256xf32> to vector<16xf32>
    %36 = vector.shape_cast %35 : vector<16xf32> to vector<16x1xf32>
    %c0_31 = arith.constant 0 : index
    %c48 = arith.constant 48 : index
    %c0_32 = arith.constant 0 : index
    %37 = vector.load %arg10[%c0_31, %c48, %c0_32] : memref<1x64x1xf32, #tpu.memory_space<vmem>>, vector<1x16x1xf32>
    %38 = vector.shape_cast %37 : vector<1x16x1xf32> to vector<16x1xf32>
    %39 = arith.addf %38, %36 : vector<16x1xf32>
    %c0_33 = arith.constant 0 : index
    %c48_34 = arith.constant 48 : index
    %c0_35 = arith.constant 0 : index
    %40 = vector.load %arg10[%c0_33, %c48_34, %c0_35] : memref<1x64x1xf32, #tpu.memory_space<vmem>>, vector<1x16x1xf32>
    %41 = vector.shape_cast %40 : vector<1x16x1xf32> to vector<16x1xf32>
    %42 = vector.shape_cast %39 : vector<16x1xf32> to vector<1x16x1xf32>
    tpu.vector_store %arg10[%c0_33, %c48_34, %c0_35], %42 {strides = array<i32>} : memref<1x64x1xf32, #tpu.memory_space<vmem>>, vector<1x16x1xf32>,
    %c0_i32_36 = arith.constant 0 : i32
    %43 = arith.cmpi eq, %arg1, %c0_i32_36 : i32
    %44 = arith.extui %43 : i1 to i32
    %c0_i32_37 = arith.constant 0 : i32
    %45 = arith.cmpi ne, %44, %c0_i32_37 : i32
    scf.if %45 {
      %c0_38 = arith.constant 0 : index
      %c0_39 = arith.constant 0 : index
      %c0_40 = arith.constant 0 : index
      %46 = vector.load %arg10[%c0_38, %c0_39, %c0_40] : memref<1x64x1xf32, #tpu.memory_space<vmem>>, vector<1x64x1xf32>
      %47 = vector.shape_cast %46 : vector<1x64x1xf32> to vector<64x1xf32>
      %cst_41 = arith.constant 3.906250e-03 : f32
      %48 = vector.broadcast %cst_41 : f32 to vector<64x1xf32>
      %49 = arith.mulf %47, %48 : vector<64x1xf32>
      %c0_42 = arith.constant 0 : index
      %c0_43 = arith.constant 0 : index
      %50 = vector.load %arg6[%c0_42, %c0_43] : memref<32x64xf32, #tpu.memory_space<vmem>>, vector<32x64xf32>
      %cst_44 = arith.constant dense<0.000000e+00> : vector<32x1xf32>
      %51 = tpu.matmul %50, %49, %cst_44 {dimension_numbers = #tpu.dot_dimension_numbers<[1], [0], [0], [1], [0, 0, 1, 1], [], []>} : vector<32x64xf32>, vector<64x1xf32>, vector<32x1xf32> -> vector<32x1xf32>
      %c0_45 = arith.constant 0 : index
      %c0_46 = arith.constant 0 : index
      %52 = vector.load %arg7[%c0_45, %c0_46] : memref<32x1xf32, #tpu.memory_space<vmem>>, vector<32x1xf32>
      %53 = arith.addf %51, %52 : vector<32x1xf32>
      %cst_47 = arith.constant 0.000000e+00 : f32
      %54 = vector.broadcast %cst_47 : f32 to vector<32x1xf32>
      %55 = arith.maximumf %53, %54 : vector<32x1xf32>
      %c0_48 = arith.constant 0 : index
      %c0_49 = arith.constant 0 : index
      %56 = vector.load %arg8[%c0_48, %c0_49] : memref<64x32xf32, #tpu.memory_space<vmem>>, vector<64x32xf32>
      %cst_50 = arith.constant dense<0.000000e+00> : vector<64x1xf32>
      %57 = tpu.matmul %56, %55, %cst_50 {dimension_numbers = #tpu.dot_dimension_numbers<[1], [0], [0], [1], [0, 0, 1, 1], [], []>} : vector<64x32xf32>, vector<32x1xf32>, vector<64x1xf32> -> vector<64x1xf32>
      %c0_51 = arith.constant 0 : index
      %c0_52 = arith.constant 0 : index
      %58 = vector.load %arg9[%c0_51, %c0_52] : memref<64x1xf32, #tpu.memory_space<vmem>>, vector<64x1xf32>
      %59 = arith.addf %57, %58 : vector<64x1xf32>
      %cst_53 = arith.constant 0.000000e+00 : f32
      %60 = vector.broadcast %cst_53 : f32 to vector<64x1xf32>
      %61 = arith.subf %60, %59 : vector<64x1xf32>
      %62 = math.exp %61 : vector<64x1xf32>
      %cst_54 = arith.constant 1.000000e+00 : f32
      %63 = vector.broadcast %cst_54 : f32 to vector<64x1xf32>
      %64 = arith.addf %63, %62 : vector<64x1xf32>
      %cst_55 = arith.constant 1.000000e+00 : f32
      %65 = vector.broadcast %cst_55 : f32 to vector<64x1xf32>
      %66 = arith.divf %65, %64 : vector<64x1xf32>
      %c0_56 = arith.constant 0 : index
      %c0_57 = arith.constant 0 : index
      %c0_58 = arith.constant 0 : index
      %67 = vector.load %arg10[%c0_56, %c0_57, %c0_58] : memref<1x64x1xf32, #tpu.memory_space<vmem>>, vector<1x64x1xf32>
      %68 = vector.shape_cast %67 : vector<1x64x1xf32> to vector<64x1xf32>
      %69 = vector.shape_cast %66 : vector<64x1xf32> to vector<1x64x1xf32>
      tpu.vector_store %arg10[%c0_56, %c0_57, %c0_58], %69 {strides = array<i32>} : memref<1x64x1xf32, #tpu.memory_space<vmem>>, vector<1x64x1xf32>,
    } else {
    }
    return
  }
  func.func @transform_0(%arg0: i32, %arg1: i32) -> (i32, i32, i32) {
    %c0_i32 = arith.constant 0 : i32
    %c0_i32_0 = arith.constant 0 : i32
    return %arg0, %c0_i32, %arg1 : i32, i32, i32
  }
  func.func @transform_1(%arg0: i32, %arg1: i32) -> (i32, i32, i32) {
    %c0_i32 = arith.constant 0 : i32
    %c0_i32_0 = arith.constant 0 : i32
    return %arg0, %c0_i32, %arg1 : i32, i32, i32
  }
  func.func @transform_2(%arg0: i32, %arg1: i32) -> (i32, i32, i32) {
    %c0_i32 = arith.constant 0 : i32
    %c0_i32_0 = arith.constant 0 : i32
    return %arg0, %c0_i32, %arg1 : i32, i32, i32
  }
  func.func @transform_3(%arg0: i32, %arg1: i32) -> (i32, i32, i32) {
    %c0_i32 = arith.constant 0 : i32
    %c0_i32_0 = arith.constant 0 : i32
    return %arg0, %c0_i32, %arg1 : i32, i32, i32
  }
  func.func @transform_4(%arg0: i32, %arg1: i32) -> (i32, i32) {
    %c0_i32 = arith.constant 0 : i32
    %c0_i32_0 = arith.constant 0 : i32
    %c0_i32_1 = arith.constant 0 : i32
    return %c0_i32, %c0_i32_0 : i32, i32
  }
  func.func @transform_5(%arg0: i32, %arg1: i32) -> (i32, i32) {
    %c0_i32 = arith.constant 0 : i32
    %c0_i32_0 = arith.constant 0 : i32
    %c0_i32_1 = arith.constant 0 : i32
    return %c0_i32, %c0_i32_0 : i32, i32
  }
  func.func @transform_6(%arg0: i32, %arg1: i32) -> (i32, i32) {
    %c0_i32 = arith.constant 0 : i32
    %c0_i32_0 = arith.constant 0 : i32
    %c0_i32_1 = arith.constant 0 : i32
    return %c0_i32, %c0_i32_0 : i32, i32
  }
  func.func @transform_7(%arg0: i32, %arg1: i32) -> (i32, i32) {
    %c0_i32 = arith.constant 0 : i32
    %c0_i32_0 = arith.constant 0 : i32
    %c0_i32_1 = arith.constant 0 : i32
    return %c0_i32, %c0_i32_0 : i32, i32
  }
  func.func @transform_8(%arg0: i32, %arg1: i32) -> (i32, i32, i32) {
    %c0_i32 = arith.constant 0 : i32
    %c0_i32_0 = arith.constant 0 : i32
    %c0_i32_1 = arith.constant 0 : i32
    return %arg0, %c0_i32, %c0_i32_0 : i32, i32, i32
  }
}

</mosaic_0001>

<llo_original>
// kernel: tpu_custom_call.1
$region0: #{tpu_custom_call.1}
  #allocation0 [shape = 'u32[]', space=smem, size = 0x4, offset = 0x4, fixed_abs, tag = 'smem constant byte address 0x4 - core index']
  #allocation1 [shape = 'u32[72,128]{1,0:T(1,128)}', space=vmem, size = 0x9000, scoped, tag = 'internal scratch']
  %s0 = inlined_call_operand.vmem [shape: f32[2,16,256], index: 0, kind: input, shape index: {}]
  %s1 = inlined_call_operand.vmem [shape: f32[2,16,256], index: 1, kind: input, shape index: {}]
  %s2 = inlined_call_operand.vmem [shape: f32[2,16,256], index: 2, kind: input, shape index: {}]
  %s3 = inlined_call_operand.hbm [shape: f32[2,16,256], index: 3, kind: input, shape index: {}]
  %s4 = inlined_call_operand.hbm [shape: f32[32,64], index: 4, kind: input, shape index: {}]
  %s5 = inlined_call_operand.vmem [shape: f32[32,1], index: 5, kind: input, shape index: {}]
  %s6 = inlined_call_operand.vmem [shape: f32[64,32], index: 6, kind: input, shape index: {}]
  %s7 = inlined_call_operand.vmem [shape: f32[64,1], index: 7, kind: input, shape index: {}]
  %s8 = inlined_call_operand.vmem [shape: f32[2,64,1], index: 8, kind: output, shape index: {}]
  %s9 = sld [smem:[#allocation0]]
  $region81: #{tpu_custom_call.1} parent=0
    _
  %s11 = ssub.s32 1, %s9
  %s12 = scalar_select 0, %s11, %s9
  $region1: #{tpu_custom_call.1} parent=0
    #allocation2 [shape = 'u8[32768]{0}', space=vmem, size = 0x8000, scoped, tag = 'input window, operand 3']
    #allocation3 [shape = 's32[2]{0}', space=sflag, size = 0x8, scoped, tag = 'scoped memory for tpu_custom_call.1']
    #allocation4 [shape = 'u8[16384]{0}', space=vmem, size = 0x4000, scoped, tag = 'input window, operand 4, single buffered']
    #allocation5 [shape = 's32[1]{0}', space=sflag, size = 0x4, scoped, tag = 'scoped memory for tpu_custom_call.1']
    %13 = vsyncpa [#allocation3], 0
    %s14 = scalar_lea.sflag [#allocation3], 1
    %15 = vsyncpa %s14, 0
    %16 = vsyncpa [#allocation5], 0
    loop: start=0, step=1, limit=4
    $region2: #{tpu_custom_call.1} parent=1 // loop_pre_header
      _
    $region3: #{tpu_custom_call.1} parent=1 // loop_header
      %s18 = sphi 0, %s22
      %p19 = scmp.ge.s32.totalorder %s18, 4
      %s25 = sphi 0, %s37
      %s26 = sphi 0, %s33
      %s27 = sphi 0, %s25
      %s28 = sphi 0, %s26
      %s29 = sphi 0, %s27
      %s30 = sphi 0, %s28
      %s42 = sphi 0, %s44
      %s45 = sphi 0, %s42
      %s46 = sphi 0, %s45
      %s62 = sphi 0, %s46
      %s70 = sphi 0, %s72
      %s73 = sphi 0, %s70
      %s74 = sphi 0, %s73
      %s90 = sphi 0, %s74
      %s98 = sphi 0, %s100
      %s101 = sphi 0, %s98
      %s102 = sphi 0, %s101
      %s118 = sphi 0, %s102
      %s126 = sphi 0, %s128
      %s129 = sphi 0, %s126
      %s130 = sphi 0, %s129
      %s146 = sphi 0, %s130
      %s150 = sphi 0, %s150
      %s152 = sphi 0, %s150
      %s153 = sphi 0, %s152
      %s167 = sphi 0, %s153
      %s171 = sphi 0, %s171
      %s173 = sphi 0, %s171
      %s174 = sphi 0, %s173
      %s188 = sphi 0, %s174
      %s192 = sphi 0, %s192
      %s194 = sphi 0, %s192
      %s195 = sphi 0, %s194
      %s209 = sphi 0, %s195
      %s213 = sphi 0, %s213
      %s215 = sphi 0, %s213
      %s216 = sphi 0, %s215
      %s230 = sphi 0, %s216
      %s236 = sphi 0, %s238
      %s239 = sphi 0, %s236
      %s240 = sphi 0, %s239
      %s256 = sphi 0, %s240
    $region4: #{tpu_custom_call.1} parent=1 // loop_header_branch
      %21 = sbr.rel (%p19) target = $region8
    $region5: #{tpu_custom_call.1} parent=1 // loop_body
      %s23 = ssub.s32 %s18, 1
      %s24 = ssub.s32 %s18, 2
      %s31 = sadd.s32 1, %s26
      %p32 = scmp.ge.s32.totalorder %s31, 1
      %s33 = scalar_select %p32, 0, %s31
      %s34 = sadd.s32 1, %s25
      %s35 = scalar_select %p32, %s34, %s25
      %p36 = scmp.ge.s32.totalorder %s35, 2
      %s37 = scalar_select %p36, 0, %s35
      %s38 = ssub.s32 %s25, %s37
      %s39 = ssub.s32 %s26, %s33
      %s40 = sor.u32 %s38, %s39
      %p41 = scmp.eq.s32.totalorder %s40, 0
      %s43 = sadd.s32 %s42, 1
      %s44 = scalar_select %p41, %s42, %s43
      %p47 = pneg %p41
      %p48 = scmp.eq.s32.totalorder %s18, 1
      %p49 = por %p47, %p48
      %p50 = scmp.ne.s32.totalorder %s42, %s45
      %p51 = scmp.eq.s32.totalorder %s18, 0
      %p52 = por %p50, %p51
      %p53 = scmp.ne.s32.totalorder %s42, %s45
      %p54 = scmp.eq.s32.totalorder %s23, 1
      %p55 = por %p53, %p54
      %p56 = scmp.ne.s32.totalorder %s45, %s46
      %p57 = scmp.eq.s32.totalorder %s23, 0
      %p58 = por %p56, %p57
      %p59 = scmp.ne.s32.totalorder %s45, %s46
      %p60 = scmp.eq.s32.totalorder %s24, 1
      %p61 = por %p59, %p60
      %p63 = scmp.ne.s32.totalorder %s46, %s62
      %p64 = scmp.eq.s32.totalorder %s24, 0
      %p65 = por %p63, %p64
      %s66 = ssub.s32 %s25, %s37
      %s67 = ssub.s32 %s26, %s33
      %s68 = sor.u32 %s66, %s67
      %p69 = scmp.eq.s32.totalorder %s68, 0
      %s71 = sadd.s32 %s70, 1
      %s72 = scalar_select %p69, %s70, %s71
      %p75 = pneg %p69
      %p76 = scmp.eq.s32.totalorder %s18, 1
      %p77 = por %p75, %p76
      %p78 = scmp.ne.s32.totalorder %s70, %s73
      %p79 = scmp.eq.s32.totalorder %s18, 0
      %p80 = por %p78, %p79
      %p81 = scmp.ne.s32.totalorder %s70, %s73
      %p82 = scmp.eq.s32.totalorder %s23, 1
      %p83 = por %p81, %p82
      %p84 = scmp.ne.s32.totalorder %s73, %s74
      %p85 = scmp.eq.s32.totalorder %s23, 0
      %p86 = por %p84, %p85
      %p87 = scmp.ne.s32.totalorder %s73, %s74
      %p88 = scmp.eq.s32.totalorder %s24, 1
      %p89 = por %p87, %p88
      %p91 = scmp.ne.s32.totalorder %s74, %s90
      %p92 = scmp.eq.s32.totalorder %s24, 0
      %p93 = por %p91, %p92
      %s94 = ssub.s32 %s25, %s37
      %s95 = ssub.s32 %s26, %s33
      %s96 = sor.u32 %s94, %s95
      %p97 = scmp.eq.s32.totalorder %s96, 0
      %s99 = sadd.s32 %s98, 1
      %s100 = scalar_select %p97, %s98, %s99
      %p103 = pneg %p97
      %p104 = scmp.eq.s32.totalorder %s18, 1
      %p105 = por %p103, %p104
      %p106 = scmp.ne.s32.totalorder %s98, %s101
      %p107 = scmp.eq.s32.totalorder %s18, 0
      %p108 = por %p106, %p107
      %p109 = scmp.ne.s32.totalorder %s98, %s101
      %p110 = scmp.eq.s32.totalorder %s23, 1
      %p111 = por %p109, %p110
      %p112 = scmp.ne.s32.totalorder %s101, %s102
      %p113 = scmp.eq.s32.totalorder %s23, 0
      %p114 = por %p112, %p113
      %p115 = scmp.ne.s32.totalorder %s101, %s102
      %p116 = scmp.eq.s32.totalorder %s24, 1
      %p117 = por %p115, %p116
      %p119 = scmp.ne.s32.totalorder %s102, %s118
      %p120 = scmp.eq.s32.totalorder %s24, 0
      %p121 = por %p119, %p120
      %s122 = ssub.s32 %s25, %s37
      %s123 = ssub.s32 %s26, %s33
      %s124 = sor.u32 %s122, %s123
      %p125 = scmp.eq.s32.totalorder %s124, 0
      %s127 = sadd.s32 %s126, 1
      %s128 = scalar_select %p125, %s126, %s127
      %p131 = pneg %p125
      %p132 = scmp.eq.s32.totalorder %s18, 1
      %p133 = por %p131, %p132
      %p134 = scmp.ne.s32.totalorder %s126, %s129
      %p135 = scmp.eq.s32.totalorder %s18, 0
      %p136 = por %p134, %p135
      %p137 = scmp.ne.s32.totalorder %s126, %s129
      %p138 = scmp.eq.s32.totalorder %s23, 1
      %p139 = por %p137, %p138
      %p140 = scmp.ne.s32.totalorder %s129, %s130
      %p141 = scmp.eq.s32.totalorder %s23, 0
      %p142 = por %p140, %p141
      %p143 = scmp.ne.s32.totalorder %s129, %s130
      %p144 = scmp.eq.s32.totalorder %s24, 1
      %p145 = por %p143, %p144
      %p147 = scmp.ne.s32.totalorder %s130, %s146
      %p148 = scmp.eq.s32.totalorder %s24, 0
      %p149 = por %p147, %p148
      %s151 = sadd.s32 %s150, 1
      %p154 = scmp.eq.s32.totalorder %s18, 1
      %p155 = scmp.ne.s32.totalorder %s150, %s152
      %p156 = scmp.eq.s32.totalorder %s18, 0
      %p157 = por %p155, %p156
      %p158 = scmp.ne.s32.totalorder %s150, %s152
      %p159 = scmp.eq.s32.totalorder %s23, 1
      %p160 = por %p158, %p159
      %p161 = scmp.ne.s32.totalorder %s152, %s153
      %p162 = scmp.eq.s32.totalorder %s23, 0
      %p163 = por %p161, %p162
      %p164 = scmp.ne.s32.totalorder %s152, %s153
      %p165 = scmp.eq.s32.totalorder %s24, 1
      %p166 = por %p164, %p165
      %p168 = scmp.ne.s32.totalorder %s153, %s167
      %p169 = scmp.eq.s32.totalorder %s24, 0
      %p170 = por %p168, %p169
      %s172 = sadd.s32 %s171, 1
      %p175 = scmp.eq.s32.totalorder %s18, 1
      %p176 = scmp.ne.s32.totalorder %s171, %s173
      %p177 = scmp.eq.s32.totalorder %s18, 0
      %p178 = por %p176, %p177
      %p179 = scmp.ne.s32.totalorder %s171, %s173
      %p180 = scmp.eq.s32.totalorder %s23, 1
      %p181 = por %p179, %p180
      %p182 = scmp.ne.s32.totalorder %s173, %s174
      %p183 = scmp.eq.s32.totalorder %s23, 0
      %p184 = por %p182, %p183
      %p185 = scmp.ne.s32.totalorder %s173, %s174
      %p186 = scmp.eq.s32.totalorder %s24, 1
      %p187 = por %p185, %p186
      %p189 = scmp.ne.s32.totalorder %s174, %s188
      %p190 = scmp.eq.s32.totalorder %s24, 0
      %p191 = por %p189, %p190
      %s193 = sadd.s32 %s192, 1
      %p196 = scmp.eq.s32.totalorder %s18, 1
      %p197 = scmp.ne.s32.totalorder %s192, %s194
      %p198 = scmp.eq.s32.totalorder %s18, 0
      %p199 = por %p197, %p198
      %p200 = scmp.ne.s32.totalorder %s192, %s194
      %p201 = scmp.eq.s32.totalorder %s23, 1
      %p202 = por %p200, %p201
      %p203 = scmp.ne.s32.totalorder %s194, %s195
      %p204 = scmp.eq.s32.totalorder %s23, 0
      %p205 = por %p203, %p204
      %p206 = scmp.ne.s32.totalorder %s194, %s195
      %p207 = scmp.eq.s32.totalorder %s24, 1
      %p208 = por %p206, %p207
      %p210 = scmp.ne.s32.totalorder %s195, %s209
      %p211 = scmp.eq.s32.totalorder %s24, 0
      %p212 = por %p210, %p211
      %s214 = sadd.s32 %s213, 1
      %p217 = scmp.eq.s32.totalorder %s18, 1
      %p218 = scmp.ne.s32.totalorder %s213, %s215
      %p219 = scmp.eq.s32.totalorder %s18, 0
      %p220 = por %p218, %p219
      %p221 = scmp.ne.s32.totalorder %s213, %s215
      %p222 = scmp.eq.s32.totalorder %s23, 1
      %p223 = por %p221, %p222
      %p224 = scmp.ne.s32.totalorder %s215, %s216
      %p225 = scmp.eq.s32.totalorder %s23, 0
      %p226 = por %p224, %p225
      %p227 = scmp.ne.s32.totalorder %s215, %s216
      %p228 = scmp.eq.s32.totalorder %s24, 1
      %p229 = por %p227, %p228
      %p231 = scmp.ne.s32.totalorder %s216, %s230
      %p232 = scmp.eq.s32.totalorder %s24, 0
      %p233 = por %p231, %p232
      %s234 = ssub.s32 %s25, %s37
      %p235 = scmp.eq.s32.totalorder %s234, 0
      %s237 = sadd.s32 %s236, 1
      %s238 = scalar_select %p235, %s236, %s237
      %p241 = pneg %p235
      %p242 = scmp.eq.s32.totalorder %s18, 1
      %p243 = por %p241, %p242
      %p244 = scmp.ne.s32.totalorder %s236, %s239
      %p245 = scmp.eq.s32.totalorder %s18, 0
      %p246 = por %p244, %p245
      %p247 = scmp.ne.s32.totalorder %s236, %s239
      %p248 = scmp.eq.s32.totalorder %s23, 1
      %p249 = por %p247, %p248
      %p250 = scmp.ne.s32.totalorder %s239, %s240
      %p251 = scmp.eq.s32.totalorder %s23, 0
      %p252 = por %p250, %p251
      %p253 = scmp.ne.s32.totalorder %s239, %s240
      %p254 = scmp.eq.s32.totalorder %s24, 1
      %p255 = por %p253, %p254
      %p257 = scmp.ne.s32.totalorder %s240, %s256
      %p258 = scmp.eq.s32.totalorder %s24, 0
      %p259 = por %p257, %p258
      %p260 = scmp.le.s32.totalorder 1, %s18
      %p261 = scmp.lt.s32.totalorder %s18, 3
      %p262 = pnand %p260, %p261
      %p263 = pneg %p262
      // Predicated region
      $region9: #{tpu_custom_call.1} parent=5 // pred_check
        _
      $region10: #{tpu_custom_call.1} parent=5 // pred_check_branch
        %265 = sbr.rel (%p262) target = $region12
      $region11: #{tpu_custom_call.1} parent=5 // pred_region
        %s266 = ssub.s32 %s18, 1
        // Predicated region
        $region13: #{tpu_custom_call.1} parent=11 // pred_check
          %p267 = pneg %p163
        $region14: #{tpu_custom_call.1} parent=11 // pred_check_branch
          %269 = sbr.rel (%p267) target = $region16
        $region15: #{tpu_custom_call.1} parent=11 // pred_region
          %271 = vsyncadd [#allocation5], 0
          %s272 = sshll.u32 %s4, 4
          %s273 = int_to_ptr.hbm [resolvable:$true] %s272
          %s274 = sshll.u32 [#allocation4], 4
          %s275 = int_to_ptr.vmem [resolvable:$true] %s274
          %280 = dma.hbm_to_vmem [thread:$0]  %s273, 512, %s275, [#allocation5], 128, 128, 8
        $region16: #{tpu_custom_call.1} parent=11 // pred_fallthru
          _
        // Predicated region
        $region17: #{tpu_custom_call.1} parent=11 // pred_check
          %p281 = pneg %p184
        $region18: #{tpu_custom_call.1} parent=11 // pred_check_branch
          %283 = sbr.rel (%p281) target = $region20
        $region19: #{tpu_custom_call.1} parent=11 // pred_region
          _
        $region20: #{tpu_custom_call.1} parent=11 // pred_fallthru
          _
        // Predicated region
        $region21: #{tpu_custom_call.1} parent=11 // pred_check
          %p284 = pneg %p205
        $region22: #{tpu_custom_call.1} parent=11 // pred_check_branch
          %286 = sbr.rel (%p284) target = $region24
        $region23: #{tpu_custom_call.1} parent=11 // pred_region
          _
        $region24: #{tpu_custom_call.1} parent=11 // pred_fallthru
          _
        // Predicated region
        $region25: #{tpu_custom_call.1} parent=11 // pred_check
          %p287 = pneg %p226
        $region26: #{tpu_custom_call.1} parent=11 // pred_check_branch
          %289 = sbr.rel (%p287) target = $region28
        $region27: #{tpu_custom_call.1} parent=11 // pred_region
          _
        $region28: #{tpu_custom_call.1} parent=11 // pred_fallthru
          _
      $region12: #{tpu_custom_call.1} parent=5 // pred_fallthru
        _
      %p290 = scmp.lt.s32.totalorder %s18, 2
      // Predicated region
      $region29: #{tpu_custom_call.1} parent=5 // pred_check
        %p291 = pneg %p290
      $region30: #{tpu_custom_call.1} parent=5 // pred_check_branch
        %293 = sbr.rel (%p291) target = $region32
      $region31: #{tpu_custom_call.1} parent=5 // pred_region
        // Predicated region
        $region33: #{tpu_custom_call.1} parent=31 // pred_check
          %p294 = pneg %p52
        $region34: #{tpu_custom_call.1} parent=31 // pred_check_branch
          %296 = sbr.rel (%p294) target = $region36
        $region35: #{tpu_custom_call.1} parent=31 // pred_region
          %s297 = smul.u32 2, %s26
          %p298 = scmp.lt.s32.totalorder %s25, 1
          %s299 = scalar_select %p298, %s25, 1
          %p300 = scmp.lt.s32.totalorder %s297, 1
          %s301 = scalar_select %p300, %s297, 1
          %s302 = smul.addr %s299, 4
          %s303 = sadd.s32 %s301, %s302
          %s304 = smul.addr %s303, 8
          %s305 = scalar_lea.vmem %s0, %s304
          %s306 = smul.u32 2, %s26
        $region36: #{tpu_custom_call.1} parent=31 // pred_fallthru
          _
        // Predicated region
        $region37: #{tpu_custom_call.1} parent=31 // pred_check
          %p307 = pneg %p80
        $region38: #{tpu_custom_call.1} parent=31 // pred_check_branch
          %309 = sbr.rel (%p307) target = $region40
        $region39: #{tpu_custom_call.1} parent=31 // pred_region
          %s310 = smul.u32 2, %s26
          %p311 = scmp.lt.s32.totalorder %s25, 1
          %s312 = scalar_select %p311, %s25, 1
          %p313 = scmp.lt.s32.totalorder %s310, 1
          %s314 = scalar_select %p313, %s310, 1
          %s315 = smul.addr %s312, 4
          %s316 = sadd.s32 %s314, %s315
          %s317 = smul.addr %s316, 8
          %s318 = scalar_lea.vmem %s1, %s317
          %s319 = smul.u32 2, %s26
        $region40: #{tpu_custom_call.1} parent=31 // pred_fallthru
          _
        // Predicated region
        $region41: #{tpu_custom_call.1} parent=31 // pred_check
          %p320 = pneg %p108
        $region42: #{tpu_custom_call.1} parent=31 // pred_check_branch
          %322 = sbr.rel (%p320) target = $region44
        $region43: #{tpu_custom_call.1} parent=31 // pred_region
          %s323 = smul.u32 2, %s26
          %p324 = scmp.lt.s32.totalorder %s25, 1
          %s325 = scalar_select %p324, %s25, 1
          %p326 = scmp.lt.s32.totalorder %s323, 1
          %s327 = scalar_select %p326, %s323, 1
          %s328 = smul.addr %s325, 4
          %s329 = sadd.s32 %s327, %s328
          %s330 = smul.addr %s329, 8
          %s331 = scalar_lea.vmem %s2, %s330
          %s332 = smul.u32 2, %s26
        $region44: #{tpu_custom_call.1} parent=31 // pred_fallthru
          _
        // Predicated region
        $region45: #{tpu_custom_call.1} parent=31 // pred_check
          %p333 = pneg %p136
        $region46: #{tpu_custom_call.1} parent=31 // pred_check_branch
          %335 = sbr.rel (%p333) target = $region48
        $region47: #{tpu_custom_call.1} parent=31 // pred_region
          %s336 = sand.u32 %s126, 1
          %s337 = scalar_lea.sflag [#allocation3], %s336
          %s338 = sand.u32 %s126, 1
          %s339 = smul.addr %s338, 32
          %s340 = scalar_lea.vmem [#allocation2], %s339
          %s341 = smul.u32 2, %s26
          %343 = vsyncadd %s337, 0
          %s344 = smul.addr %s25, 4
          %s345 = sadd.s32 %s341, %s344
          %s346 = smul.addr %s345, 8
          %s347 = scalar_lea.hbm %s3, %s346
          %s348 = sshll.u32 %s347, 4
          %s349 = int_to_ptr.hbm [resolvable:$true] %s348
          %s350 = sshll.u32 %s340, 4
          %s351 = int_to_ptr.vmem [resolvable:$true] %s350
          %356 = dma.hbm_to_vmem [thread:$0]  %s349, 512, %s351, %s337, 256, 256, 16
        $region48: #{tpu_custom_call.1} parent=31 // pred_fallthru
          _
      $region32: #{tpu_custom_call.1} parent=5 // pred_fallthru
        _
      %p357 = scmp.le.s32.totalorder 1, %s18
      %p358 = scmp.lt.s32.totalorder %s18, 3
      %p359 = pnand %p357, %p358
      %p360 = pneg %p359
      // Predicated region
      $region49: #{tpu_custom_call.1} parent=5 // pred_check
        _
      $region50: #{tpu_custom_call.1} parent=5 // pred_check_branch
        %362 = sbr.rel (%p359) target = $region52
      $region51: #{tpu_custom_call.1} parent=5 // pred_region
        %s363 = ssub.s32 %s18, 1
        %s364 = sand.u32 %s129, 1
        %s365 = scalar_lea.sflag [#allocation3], %s364
        %s366 = sand.u32 %s129, 1
        %s367 = smul.addr %s366, 32
        %s368 = scalar_lea.vmem [#allocation2], %s367
        // Predicated region
        $region53: #{tpu_custom_call.1} parent=51 // pred_check
          %p369 = pneg %p142
        $region54: #{tpu_custom_call.1} parent=51 // pred_check_branch
          %371 = sbr.rel (%p369) target = $region56
        $region55: #{tpu_custom_call.1} parent=51 // pred_region
          %373 = dma.done %s365, 512
        $region56: #{tpu_custom_call.1} parent=51 // pred_fallthru
          _
        // Predicated region
        $region57: #{tpu_custom_call.1} parent=51 // pred_check
          %p374 = pneg %p163
        $region58: #{tpu_custom_call.1} parent=51 // pred_check_branch
          %376 = sbr.rel (%p374) target = $region60
        $region59: #{tpu_custom_call.1} parent=51 // pred_region
          %378 = dma.done [#allocation5], 512
        $region60: #{tpu_custom_call.1} parent=51 // pred_fallthru
          _
        %s379 = smul.u32 2, %s28
        %p380 = scmp.lt.s32.totalorder %s27, 1
        %s381 = scalar_select %p380, %s27, 1
        %p382 = scmp.lt.s32.totalorder %s379, 1
        %s383 = scalar_select %p382, %s379, 1
        %s384 = smul.addr %s381, 4
        %s385 = sadd.s32 %s383, %s384
        %s386 = smul.addr %s385, 8
        %s387 = scalar_lea.vmem %s0, %s386
        %p388 = pneg %p58
        %p389 = pneg %p55
        %s390 = smul.u32 2, %s28
        %p391 = scmp.lt.s32.totalorder %s27, 1
        %s392 = scalar_select %p391, %s27, 1
        %p393 = scmp.lt.s32.totalorder %s390, 1
        %s394 = scalar_select %p393, %s390, 1
        %s395 = smul.addr %s392, 4
        %s396 = sadd.s32 %s394, %s395
        %s397 = smul.addr %s396, 8
        %s398 = scalar_lea.vmem %s1, %s397
        %p399 = pneg %p86
        %p400 = pneg %p83
        %s401 = smul.u32 2, %s28
        %p402 = scmp.lt.s32.totalorder %s27, 1
        %s403 = scalar_select %p402, %s27, 1
        %p404 = scmp.lt.s32.totalorder %s401, 1
        %s405 = scalar_select %p404, %s401, 1
        %s406 = smul.addr %s403, 4
        %s407 = sadd.s32 %s405, %s406
        %s408 = smul.addr %s407, 8
        %s409 = scalar_lea.vmem %s2, %s408
        %p410 = pneg %p114
        %p411 = pneg %p111
        %s412 = sand.u32 %s129, 1
        %s413 = scalar_lea.sflag [#allocation3], %s412
        %s414 = sand.u32 %s129, 1
        %s415 = smul.addr %s414, 32
        %s416 = scalar_lea.vmem [#allocation2], %s415
        %p417 = pneg %p142
        %p418 = pneg %p139
        %p419 = pneg %p163
        %p420 = pneg %p160
        %p421 = pneg %p184
        %p422 = pneg %p181
        %p423 = pneg %p205
        %p424 = pneg %p202
        %p425 = pneg %p226
        %p426 = pneg %p223
        %p427 = pneg %p252
        %p428 = pneg %p249
        %p429 = scmp.lt.s32.totalorder %s27, 1
        %s430 = scalar_select %p429, %s27, 1
        %s431 = smul.addr %s430, 8
        %s432 = smul.addr %s431, 8
        %s433 = scalar_lea.vmem %s8, %s432
        %s434 = smul.u32 2, %s28
        %p435 = scmp.lt.s32.totalorder %s27, 1
        %s436 = scalar_select %p435, %s27, 1
        %p437 = scmp.lt.s32.totalorder %s434, 1
        %s438 = scalar_select %p437, %s434, 1
        %s439 = smul.addr %s436, 4
        %s440 = sadd.s32 %s438, %s439
        %s441 = smul.addr %s440, 8
        %s442 = scalar_lea.vmem %s0, %s441
        %s443 = smul.u32 2, %s28
        %s444 = smul.u32 2, %s28
        %p445 = scmp.lt.s32.totalorder %s27, 1
        %s446 = scalar_select %p445, %s27, 1
        %p447 = scmp.lt.s32.totalorder %s444, 1
        %s448 = scalar_select %p447, %s444, 1
        %s449 = smul.addr %s446, 4
        %s450 = sadd.s32 %s448, %s449
        %s451 = smul.addr %s450, 8
        %s452 = scalar_lea.vmem %s1, %s451
        %s453 = smul.u32 2, %s28
        %s454 = smul.u32 2, %s28
        %p455 = scmp.lt.s32.totalorder %s27, 1
        %s456 = scalar_select %p455, %s27, 1
        %p457 = scmp.lt.s32.totalorder %s454, 1
        %s458 = scalar_select %p457, %s454, 1
        %s459 = smul.addr %s456, 4
        %s460 = sadd.s32 %s458, %s459
        %s461 = smul.addr %s460, 8
        %s462 = scalar_lea.vmem %s2, %s461
        %s463 = smul.u32 2, %s28
        %s464 = smul.u32 2, %s28
        %p465 = scmp.lt.s32.totalorder %s27, 1
        %s466 = scalar_select %p465, %s27, 1
        %s467 = smul.addr %s466, 8
        %s468 = smul.addr %s467, 8
        %s469 = scalar_lea.vmem %s8, %s468
        %p470 = scmp.eq.s32.totalorder %s28, 0
        // Predicated region
        $region61: #{tpu_custom_call.1} parent=51 // pred_check
          %p471 = pneg %p470
        $region62: #{tpu_custom_call.1} parent=51 // pred_check_branch
          %473 = sbr.rel (%p471) target = $region64
        $region63: #{tpu_custom_call.1} parent=51 // pred_region
          %vm474 = vcmask 7168
          %475 = vst.msk [vmem:[%s469] sm:$0xff] %vm474, 0.0
          %476 = vst.msk [vmem:[%s469 + $0x8] sm:$0xff] %vm474, 0.0
          %477 = vst.msk [vmem:[%s469 + $0x10] sm:$0xff] %vm474, 0.0
          %478 = vst.msk [vmem:[%s469 + $0x18] sm:$0xff] %vm474, 0.0
          %479 = vst.msk [vmem:[%s469 + $0x20] sm:$0xff] %vm474, 0.0
          %480 = vst.msk [vmem:[%s469 + $0x28] sm:$0xff] %vm474, 0.0
          %481 = vst.msk [vmem:[%s469 + $0x30] sm:$0xff] %vm474, 0.0
          %482 = vst.msk [vmem:[%s469 + $0x38] sm:$0xff] %vm474, 0.0
        $region64: #{tpu_custom_call.1} parent=51 // pred_fallthru
          _
        %v483 = vld [vmem:[%s442] sm:$0xff]
        %v484 = vld [vmem:[%s442 + $0x8] sm:$0xff]
        %v485 = vld [vmem:[%s442 + $0x10] sm:$0xff]
        %v486 = vld [vmem:[%s442 + $0x18] sm:$0xff]
        %v487 = vadd.f32 %v483, %v484
        %488 = vadd.xlane.f32.xlu0 %v487
        %v489 = vpop.xlane.xlu0 %488
        %v490 = vadd.f32 %v485, %v486
        %491 = vadd.xlane.f32.xlu0 %v490
        %v492 = vpop.xlane.xlu0 %491
        %v493 = vld [vmem:[%s469] sm:$0xff]
        %v494 = vld [vmem:[%s469 + $0x8] sm:$0xff]
        %v495 = vadd.f32 %v493, %v489
        %v496 = vadd.f32 %v494, %v492
        %vm497 = vcmask 7168
        %498 = vst.msk [vmem:[%s469] sm:$0xff] %vm497, %v495
        %499 = vst.msk [vmem:[%s469 + $0x8] sm:$0xff] %vm497, %v496
        %v500 = vld [vmem:[%s452] sm:$0xff]
        %v501 = vld [vmem:[%s452 + $0x8] sm:$0xff]
        %v502 = vld [vmem:[%s452 + $0x10] sm:$0xff]
        %v503 = vld [vmem:[%s452 + $0x18] sm:$0xff]
        %v504 = vadd.f32 %v500, %v501
        %505 = vadd.xlane.f32.xlu0 %v504
        %v506 = vpop.xlane.xlu0 %505
        %v507 = vadd.f32 %v502, %v503
        %508 = vadd.xlane.f32.xlu0 %v507
        %v509 = vpop.xlane.xlu0 %508
        %v510 = vld [vmem:[%s469 + $0x10] sm:$0xff]
        %v511 = vld [vmem:[%s469 + $0x18] sm:$0xff]
        %v512 = vadd.f32 %v510, %v506
        %v513 = vadd.f32 %v511, %v509
        %514 = vst.msk [vmem:[%s469 + $0x10] sm:$0xff] %vm497, %v512
        %515 = vst.msk [vmem:[%s469 + $0x18] sm:$0xff] %vm497, %v513
        %v516 = vld [vmem:[%s462] sm:$0xff]
        %v517 = vld [vmem:[%s462 + $0x8] sm:$0xff]
        %v518 = vld [vmem:[%s462 + $0x10] sm:$0xff]
        %v519 = vld [vmem:[%s462 + $0x18] sm:$0xff]
        %v520 = vadd.f32 %v516, %v517
        %521 = vadd.xlane.f32.xlu0 %v520
        %v522 = vpop.xlane.xlu0 %521
        %v523 = vadd.f32 %v518, %v519
        %524 = vadd.xlane.f32.xlu0 %v523
        %v525 = vpop.xlane.xlu0 %524
        %v526 = vld [vmem:[%s469 + $0x20] sm:$0xff]
        %v527 = vld [vmem:[%s469 + $0x28] sm:$0xff]
        %v528 = vadd.f32 %v526, %v522
        %v529 = vadd.f32 %v527, %v525
        %530 = vst.msk [vmem:[%s469 + $0x20] sm:$0xff] %vm497, %v528
        %531 = vst.msk [vmem:[%s469 + $0x28] sm:$0xff] %vm497, %v529
        %v532 = vld [vmem:[%s368] sm:$0xff]
        %v533 = vld [vmem:[%s368 + $0x8] sm:$0xff]
        %v534 = vld [vmem:[%s368 + $0x10] sm:$0xff]
        %v535 = vld [vmem:[%s368 + $0x18] sm:$0xff]
        %v536 = vadd.f32 %v532, %v533
        %537 = vadd.xlane.f32.xlu0 %v536
        %v538 = vpop.xlane.xlu0 %537
        %v539 = vadd.f32 %v534, %v535
        %540 = vadd.xlane.f32.xlu0 %v539
        %v541 = vpop.xlane.xlu0 %540
        %v542 = vld [vmem:[%s469 + $0x30] sm:$0xff]
        %v543 = vld [vmem:[%s469 + $0x38] sm:$0xff]
        %v544 = vadd.f32 %v542, %v538
        %v545 = vadd.f32 %v543, %v541
        %546 = vst.msk [vmem:[%s469 + $0x30] sm:$0xff] %vm497, %v544
        %547 = vst.msk [vmem:[%s469 + $0x38] sm:$0xff] %vm497, %v545
        // Predicated region
        $region65: #{tpu_custom_call.1} parent=51 // pred_check
          %p548 = pneg %p470
        $region66: #{tpu_custom_call.1} parent=51 // pred_check_branch
          %550 = sbr.rel (%p548) target = $region68
        $region67: #{tpu_custom_call.1} parent=51 // pred_region
          %v551 = vld [vmem:[%s469] sm:$0xff]
          %v552 = vld [vmem:[%s469 + $0x8] sm:$0xff]
          %v553 = vld [vmem:[%s469 + $0x10] sm:$0xff]
          %v554 = vld [vmem:[%s469 + $0x18] sm:$0xff]
          %v555 = vld [vmem:[%s469 + $0x20] sm:$0xff]
          %v556 = vld [vmem:[%s469 + $0x28] sm:$0xff]
          %v557 = vld [vmem:[%s469 + $0x30] sm:$0xff]
          %v558 = vld [vmem:[%s469 + $0x38] sm:$0xff]
          %v559 = vmul.f32 %v551, 0.00390625
          %v560 = vmul.f32 %v552, 0.00390625
          %v561 = vmul.f32 %v553, 0.00390625
          %v562 = vmul.f32 %v554, 0.00390625
          %v563 = vmul.f32 %v555, 0.00390625
          %v564 = vmul.f32 %v556, 0.00390625
          %v565 = vmul.f32 %v557, 0.00390625
          %v566 = vmul.f32 %v558, 0.00390625
          %v567 = vld [vmem:[#allocation4] sm:$0xff]
          %v568 = vld [vmem:[#allocation4 + $0x8] sm:$0xff]
          %v569 = vld [vmem:[#allocation4 + $0x10] sm:$0xff]
          %v570 = vld [vmem:[#allocation4 + $0x18] sm:$0xff]
          %v571 = vld [vmem:[%s5] sm:$0xff]
          %v572 = vld [vmem:[%s5 + $0x8] sm:$0xff]
          %v573 = vld [vmem:[%s5 + $0x10] sm:$0xff]
          %v574 = vld [vmem:[%s5 + $0x18] sm:$0xff]
          %vm575 = vcmask 523264
          %v577 = vsel %vm575, %v567, 0
          %v580 = vsel %vm575, %v568, 0
          %v583 = vsel %vm575, %v569, 0
          %v586 = vsel %vm575, %v570, 0
          %588 = vmatpush.msra.mxu0 0.0
          %589 = vmatpush.msra.mxu0 0.0
          %590 = vmatpush.msra.mxu0 0.0
          %591 = vmatpush.msra.mxu0 0.0
          %592 = vmatpush.msra.mxu0 0.0
          %593 = vmatpush.msra.mxu0 0.0
          %594 = vmatpush.msra.mxu0 0.0
          %595 = vmatpush.msra.mxu0 0.0
          %596 = vmatpush.msra.mxu0 %v566
          %597 = vmatpush.msra.mxu0 %v565
          %598 = vmatpush.msra.mxu0 %v564
          %599 = vmatpush.msra.mxu0 %v563
          %600 = vmatpush.msra.mxu0 %v562
          %601 = vmatpush.msra.mxu0 %v561
          %602 = vmatpush.msra.mxu0 %v560
          %603 = vmatpush.msra.mxu0 %v559
          %604 = vmatmul.f32.gmra.mxu0 %v577
          %v605 = vpop.f32.mrf.mxu0
          %v606 = vadd.f32 %v571, %v605
          %607 = vmatmul.f32.gmra.mxu0 %v580
          %v608 = vpop.f32.mrf.mxu0
          %v609 = vadd.f32 %v572, %v608
          %610 = vmatmul.f32.gmra.mxu0 %v583
          %v611 = vpop.f32.mrf.mxu0
          %v612 = vadd.f32 %v573, %v611
          %613 = vmatmul.f32.gmra.mxu0 %v586
          %v614 = vpop.f32.mrf.mxu0
          %v615 = vadd.f32 %v574, %v614
          %616 = vdwg.mxu0
          %v617 = vmax.f32 %v606, 0.0
          %v618 = vmax.f32 %v609, 0.0
          %v619 = vmax.f32 %v612, 0.0
          %v620 = vmax.f32 %v615, 0.0
          %v621 = vld [vmem:[%s6] sm:$0xff]
          %v622 = vld [vmem:[%s6 + $0x8] sm:$0xff]
          %v623 = vld [vmem:[%s6 + $0x10] sm:$0xff]
          %v624 = vld [vmem:[%s6 + $0x18] sm:$0xff]
          %v625 = vld [vmem:[%s6 + $0x20] sm:$0xff]
          %v626 = vld [vmem:[%s6 + $0x28] sm:$0xff]
          %v627 = vld [vmem:[%s6 + $0x30] sm:$0xff]
          %v628 = vld [vmem:[%s6 + $0x38] sm:$0xff]
          %v629 = vld [vmem:[%s7] sm:$0xff]
          %v630 = vld [vmem:[%s7 + $0x8] sm:$0xff]
          %v631 = vld [vmem:[%s7 + $0x10] sm:$0xff]
          %v632 = vld [vmem:[%s7 + $0x18] sm:$0xff]
          %v633 = vld [vmem:[%s7 + $0x20] sm:$0xff]
          %v634 = vld [vmem:[%s7 + $0x28] sm:$0xff]
          %v635 = vld [vmem:[%s7 + $0x30] sm:$0xff]
          %v636 = vld [vmem:[%s7 + $0x38] sm:$0xff]
          %vm637 = vcmask 261120
          %v639 = vsel %vm637, %v621, 0
          %v642 = vsel %vm637, %v622, 0
          %v645 = vsel %vm637, %v623, 0
          %v648 = vsel %vm637, %v624, 0
          %v651 = vsel %vm637, %v625, 0
          %v654 = vsel %vm637, %v626, 0
          %v657 = vsel %vm637, %v627, 0
          %v660 = vsel %vm637, %v628, 0
          %662 = vmatpush.msra.mxu0 0.0
          %663 = vmatpush.msra.mxu0 0.0
          %664 = vmatpush.msra.mxu0 0.0
          %665 = vmatpush.msra.mxu0 0.0
          %666 = vmatpush.msra.mxu0 0.0
          %667 = vmatpush.msra.mxu0 0.0
          %668 = vmatpush.msra.mxu0 0.0
          %669 = vmatpush.msra.mxu0 0.0
          %670 = vmatpush.msra.mxu0 0.0
          %671 = vmatpush.msra.mxu0 0.0
          %672 = vmatpush.msra.mxu0 0.0
          %673 = vmatpush.msra.mxu0 0.0
          %674 = vmatpush.msra.mxu0 %v620
          %675 = vmatpush.msra.mxu0 %v619
          %676 = vmatpush.msra.mxu0 %v618
          %677 = vmatpush.msra.mxu0 %v617
          %678 = vmatmul.f32.gmra.mxu0 %v639
          %v679 = vpop.f32.mrf.mxu0
          %v680 = vadd.f32 %v629, %v679
          %681 = vmatmul.f32.gmra.mxu0 %v642
          %v682 = vpop.f32.mrf.mxu0
          %v683 = vadd.f32 %v630, %v682
          %684 = vmatmul.f32.gmra.mxu0 %v645
          %v685 = vpop.f32.mrf.mxu0
          %v686 = vadd.f32 %v631, %v685
          %687 = vmatmul.f32.gmra.mxu0 %v648
          %v688 = vpop.f32.mrf.mxu0
          %v689 = vadd.f32 %v632, %v688
          %690 = vmatmul.f32.gmra.mxu0 %v651
          %v691 = vpop.f32.mrf.mxu0
          %v692 = vadd.f32 %v633, %v691
          %693 = vmatmul.f32.gmra.mxu0 %v654
          %v694 = vpop.f32.mrf.mxu0
          %v695 = vadd.f32 %v634, %v694
          %696 = vmatmul.f32.gmra.mxu0 %v657
          %v697 = vpop.f32.mrf.mxu0
          %v698 = vadd.f32 %v635, %v697
          %699 = vmatmul.f32.gmra.mxu0 %v660
          %v700 = vpop.f32.mrf.mxu0
          %v701 = vadd.f32 %v636, %v700
          %702 = vdwg.mxu0
          %v703 = vsub.f32 0.0, %v680
          %v704 = vsub.f32 0.0, %v683
          %v705 = vsub.f32 0.0, %v686
          %v706 = vsub.f32 0.0, %v689
          %v707 = vsub.f32 0.0, %v692
          %v708 = vsub.f32 0.0, %v695
          %v709 = vsub.f32 0.0, %v698
          %v710 = vsub.f32 0.0, %v701
          %v711 = vmul.f32 %v703, 1.442695
          %v712 = vpow.pop %v711
          %v713 = vmul.f32 %v704, 1.442695
          %v714 = vpow.pop %v713
          %v715 = vmul.f32 %v705, 1.442695
          %v716 = vpow.pop %v715
          %v717 = vmul.f32 %v706, 1.442695
          %v718 = vpow.pop %v717
          %v719 = vmul.f32 %v707, 1.442695
          %v720 = vpow.pop %v719
          %v721 = vmul.f32 %v708, 1.442695
          %v722 = vpow.pop %v721
          %v723 = vmul.f32 %v709, 1.442695
          %v724 = vpow.pop %v723
          %v725 = vmul.f32 %v710, 1.442695
          %v726 = vpow.pop %v725
          %v727 = vadd.f32 %v712, 1.0
          %v728 = vadd.f32 %v714, 1.0
          %v729 = vadd.f32 %v716, 1.0
          %v730 = vadd.f32 %v718, 1.0
          %v731 = vadd.f32 %v720, 1.0
          %v732 = vadd.f32 %v722, 1.0
          %v733 = vadd.f32 %v724, 1.0
          %v734 = vadd.f32 %v726, 1.0
          %v735 = vrcp.pop %v727
          %v736 = vmul.f32 %v727, %v735
          %v737 = vsub.f32 1.0, %v736
          %v738 = vmul.f32 %v735, %v737
          %v739 = vadd.f32 %v735, %v738
          %vm740 = vweird.f32 %v727
          %vm741 = vweird.f32 %v735
          %vm742 = vmor %vm740, %vm741
          %v743 = vsel %vm742, %v735, %v739
          %v744 = vand.u32 2147483647, %v727
          %vm745 = vcmp.eq.f32.partialorder %v744, 8.507059e+37
          %v746 = vand.u32 %v727, 2147483648
          %v747 = vor.u32 1.1754944e-38, %v746
          %v748 = vsel %vm745, %v747, %v743
          %v749 = vmul.f32 1.0, %v748
          %v750 = vrcp.pop %v728
          %v751 = vmul.f32 %v728, %v750
          %v752 = vsub.f32 1.0, %v751
          %v753 = vmul.f32 %v750, %v752
          %v754 = vadd.f32 %v750, %v753
          %vm755 = vweird.f32 %v728
          %vm756 = vweird.f32 %v750
          %vm757 = vmor %vm755, %vm756
          %v758 = vsel %vm757, %v750, %v754
          %v759 = vand.u32 2147483647, %v728
          %vm760 = vcmp.eq.f32.partialorder %v759, 8.507059e+37
          %v761 = vand.u32 %v728, 2147483648
          %v762 = vor.u32 1.1754944e-38, %v761
          %v763 = vsel %vm760, %v762, %v758
          %v764 = vmul.f32 1.0, %v763
          %v765 = vrcp.pop %v729
          %v766 = vmul.f32 %v729, %v765
          %v767 = vsub.f32 1.0, %v766
          %v768 = vmul.f32 %v765, %v767
          %v769 = vadd.f32 %v765, %v768
          %vm770 = vweird.f32 %v729
          %vm771 = vweird.f32 %v765
          %vm772 = vmor %vm770, %vm771
          %v773 = vsel %vm772, %v765, %v769
          %v774 = vand.u32 2147483647, %v729
          %vm775 = vcmp.eq.f32.partialorder %v774, 8.507059e+37
          %v776 = vand.u32 %v729, 2147483648
          %v777 = vor.u32 1.1754944e-38, %v776
          %v778 = vsel %vm775, %v777, %v773
          %v779 = vmul.f32 1.0, %v778
          %v780 = vrcp.pop %v730
          %v781 = vmul.f32 %v730, %v780
          %v782 = vsub.f32 1.0, %v781
          %v783 = vmul.f32 %v780, %v782
          %v784 = vadd.f32 %v780, %v783
          %vm785 = vweird.f32 %v730
          %vm786 = vweird.f32 %v780
          %vm787 = vmor %vm785, %vm786
          %v788 = vsel %vm787, %v780, %v784
          %v789 = vand.u32 2147483647, %v730
          %vm790 = vcmp.eq.f32.partialorder %v789, 8.507059e+37
          %v791 = vand.u32 %v730, 2147483648
          %v792 = vor.u32 1.1754944e-38, %v791
          %v793 = vsel %vm790, %v792, %v788
          %v794 = vmul.f32 1.0, %v793
          %v795 = vrcp.pop %v731
          %v796 = vmul.f32 %v731, %v795
          %v797 = vsub.f32 1.0, %v796
          %v798 = vmul.f32 %v795, %v797
          %v799 = vadd.f32 %v795, %v798
          %vm800 = vweird.f32 %v731
          %vm801 = vweird.f32 %v795
          %vm802 = vmor %vm800, %vm801
          %v803 = vsel %vm802, %v795, %v799
          %v804 = vand.u32 2147483647, %v731
          %vm805 = vcmp.eq.f32.partialorder %v804, 8.507059e+37
          %v806 = vand.u32 %v731, 2147483648
          %v807 = vor.u32 1.1754944e-38, %v806
          %v808 = vsel %vm805, %v807, %v803
          %v809 = vmul.f32 1.0, %v808
          %v810 = vrcp.pop %v732
          %v811 = vmul.f32 %v732, %v810
          %v812 = vsub.f32 1.0, %v811
          %v813 = vmul.f32 %v810, %v812
          %v814 = vadd.f32 %v810, %v813
          %vm815 = vweird.f32 %v732
          %vm816 = vweird.f32 %v810
          %vm817 = vmor %vm815, %vm816
          %v818 = vsel %vm817, %v810, %v814
          %v819 = vand.u32 2147483647, %v732
          %vm820 = vcmp.eq.f32.partialorder %v819, 8.507059e+37
          %v821 = vand.u32 %v732, 2147483648
          %v822 = vor.u32 1.1754944e-38, %v821
          %v823 = vsel %vm820, %v822, %v818
          %v824 = vmul.f32 1.0, %v823
          %v825 = vrcp.pop %v733
          %v826 = vmul.f32 %v733, %v825
          %v827 = vsub.f32 1.0, %v826
          %v828 = vmul.f32 %v825, %v827
          %v829 = vadd.f32 %v825, %v828
          %vm830 = vweird.f32 %v733
          %vm831 = vweird.f32 %v825
          %vm832 = vmor %vm830, %vm831
          %v833 = vsel %vm832, %v825, %v829
          %v834 = vand.u32 2147483647, %v733
          %vm835 = vcmp.eq.f32.partialorder %v834, 8.507059e+37
          %v836 = vand.u32 %v733, 2147483648
          %v837 = vor.u32 1.1754944e-38, %v836
          %v838 = vsel %vm835, %v837, %v833
          %v839 = vmul.f32 1.0, %v838
          %v840 = vrcp.pop %v734
          %v841 = vmul.f32 %v734, %v840
          %v842 = vsub.f32 1.0, %v841
          %v843 = vmul.f32 %v840, %v842
          %v844 = vadd.f32 %v840, %v843
          %vm845 = vweird.f32 %v734
          %vm846 = vweird.f32 %v840
          %vm847 = vmor %vm845, %vm846
          %v848 = vsel %vm847, %v840, %v844
          %v849 = vand.u32 2147483647, %v734
          %vm850 = vcmp.eq.f32.partialorder %v849, 8.507059e+37
          %v851 = vand.u32 %v734, 2147483648
          %v852 = vor.u32 1.1754944e-38, %v851
          %v853 = vsel %vm850, %v852, %v848
          %v854 = vmul.f32 1.0, %v853
          %855 = vst.msk [vmem:[%s469] sm:$0xff] %vm497, %v749
          %856 = vst.msk [vmem:[%s469 + $0x8] sm:$0xff] %vm497, %v764
          %857 = vst.msk [vmem:[%s469 + $0x10] sm:$0xff] %vm497, %v779
          %858 = vst.msk [vmem:[%s469 + $0x18] sm:$0xff] %vm497, %v794
          %859 = vst.msk [vmem:[%s469 + $0x20] sm:$0xff] %vm497, %v809
          %860 = vst.msk [vmem:[%s469 + $0x28] sm:$0xff] %vm497, %v824
          %861 = vst.msk [vmem:[%s469 + $0x30] sm:$0xff] %vm497, %v839
          %862 = vst.msk [vmem:[%s469 + $0x38] sm:$0xff] %vm497, %v854
        $region68: #{tpu_custom_call.1} parent=51 // pred_fallthru
          _
        %p863 = scmp.lt.s32.totalorder %s27, 1
        %s864 = scalar_select %p863, %s27, 1
        %s865 = smul.addr %s864, 8
        %s866 = smul.addr %s865, 8
        %s867 = scalar_lea.vmem %s8, %s866
        // Predicated region
        $region69: #{tpu_custom_call.1} parent=51 // pred_check
          %p868 = pneg %p249
        $region70: #{tpu_custom_call.1} parent=51 // pred_check_branch
          %870 = sbr.rel (%p868) target = $region72
        $region71: #{tpu_custom_call.1} parent=51 // pred_region
          _
        $region72: #{tpu_custom_call.1} parent=51 // pred_fallthru
          _
      $region52: #{tpu_custom_call.1} parent=5 // pred_fallthru
        _
      %p871 = scmp.le.s32.totalorder 2, %s18
      // Predicated region
      $region73: #{tpu_custom_call.1} parent=5 // pred_check
        %p872 = pneg %p871
      $region74: #{tpu_custom_call.1} parent=5 // pred_check_branch
        %874 = sbr.rel (%p872) target = $region76
      $region75: #{tpu_custom_call.1} parent=5 // pred_region
        %s875 = ssub.s32 %s18, 2
        // Predicated region
        $region77: #{tpu_custom_call.1} parent=75 // pred_check
          %p876 = pneg %p255
        $region78: #{tpu_custom_call.1} parent=75 // pred_check_branch
          %878 = sbr.rel (%p876) target = $region80
        $region79: #{tpu_custom_call.1} parent=75 // pred_region
          %p879 = scmp.lt.s32.totalorder %s29, 1
          %s880 = scalar_select %p879, %s29, 1
          %s881 = smul.addr %s880, 8
          %s882 = smul.addr %s881, 8
          %s883 = scalar_lea.vmem %s8, %s882
        $region80: #{tpu_custom_call.1} parent=75 // pred_fallthru
          _
      $region76: #{tpu_custom_call.1} parent=5 // pred_fallthru
        _
    $region6: #{tpu_custom_call.1} parent=1 // loop_footer
      %s22 = sadd.s32 1, %s18
    $region7: #{tpu_custom_call.1} parent=1 // loop_footer_branch
      %17 = sbr.rel target = $region3
    $region8: #{tpu_custom_call.1} parent=1 // loop_exit
      _
    %884 = vsyncpa [#allocation3], 1
    %s885 = scalar_lea.sflag [#allocation3], 1
    %886 = vsyncpa %s885, 1
    %887 = vsyncpa [#allocation5], 1

</llo_original>
